<compile_context>
chip_gen: v7x
topology: tpu7x:2x2x1
jax: 0.10.0
libtpu: 0.0.40
codegen_flags: <defaults>
</compile_context>

<pallas_src>
import functools

import jax
import jax.numpy as jnp
from jax.experimental import pallas as pl
from jax.experimental.pallas import tpu as pltpu


def _residual_linear_kernel(seed_ref, x_ref, w_ref, b_ref, o_ref, *, dropout_p):
    x = x_ref[...]                                    # (tm, D), original dtype

    # Inner module: Linear(D, D).  bf16 x bf16 -> f32 accumulate on the MXU.
    y = jnp.dot(x.astype(jnp.bfloat16), w_ref[...],
                preferred_element_type=jnp.float32)
    y = y + b_ref[...].astype(jnp.float32)

    # nn.Dropout(p) in training mode: keep w.p. (1-p), scale kept by 1/(1-p).
    # p == 0.0 (the module default) is a compile-time no-op (eval/identity).
    if dropout_p > 0.0:
        keep_prob = 1.0 - dropout_p
        pltpu.prng_seed(seed_ref[0] + pl.program_id(0))
        bits = pltpu.prng_random_bits(y.shape).astype(jnp.uint32)
        # Clamp so keep_prob ~= 1.0 cannot wrap the uint32 threshold to 0.
        thresh = min(int(round(keep_prob * 4294967296.0)), 4294967295)
        keep = bits < jnp.uint32(thresh)
        y = jnp.where(keep, y * (1.0 / keep_prob), 0.0)

    # Residual add with args[0] (full precision activations).
    o_ref[...] = (y + x.astype(jnp.float32)).astype(o_ref.dtype)


def residual_linear(x, w_t, b, seed=0, *, dropout_p=0.0, tm=256):
    """dropout(x @ w_t + b) + x, fused in one Pallas kernel.

    x:   (B, N, D) activations
    w_t: (D, D) linear weight, already transposed to (in, out)
    b:   (D,) or (1, D) bias
    """
    B, N, D = x.shape
    assert D % 128 == 0, "hidden dim must be lane-dense (multiple of 128)"
    assert tm % 128 == 0, "row tile must be a multiple of 128"

    M = B * N
    x2 = x.reshape(M, D)

    # Pad rows up to a tile multiple (padded rows are sliced off afterwards).
    Mp = ((M + tm - 1) // tm) * tm
    if Mp != M:
        x2 = jnp.pad(x2, ((0, Mp - M), (0, 0)))

    # Resident weight in bf16 (native MXU dtype, half the VMEM footprint).
    w_bf16 = w_t.astype(jnp.bfloat16)
    b2 = jnp.reshape(b, (1, D)).astype(jnp.float32)

    kernel = functools.partial(_residual_linear_kernel,
                               dropout_p=float(dropout_p))

    flops = 2 * Mp * D * D
    bytes_accessed = (
        x2.size * x2.dtype.itemsize          # activations in
        + w_bf16.size * w_bf16.dtype.itemsize  # weight
        + b2.size * b2.dtype.itemsize          # bias
        + Mp * D * x.dtype.itemsize)           # output

    out = pl.pallas_call(
        kernel,
        out_shape=jax.ShapeDtypeStruct((Mp, D), x.dtype),
        grid_spec=pltpu.PrefetchScalarGridSpec(
            num_scalar_prefetch=1,            # dropout PRNG seed lives in SMEM
            grid=(Mp // tm,),
            in_specs=[
                pl.BlockSpec((tm, D), lambda i, seed_ref: (i, 0)),   # x tile
                pl.BlockSpec((D, D), lambda i, seed_ref: (0, 0)),    # weight (resident)
                pl.BlockSpec((1, D), lambda i, seed_ref: (0, 0)),    # bias (resident)
            ],
            out_specs=pl.BlockSpec((tm, D), lambda i, seed_ref: (i, 0)),
        ),
        compiler_params=pltpu.CompilerParams(
            dimension_semantics=("parallel",),
            vmem_limit_bytes=64 * 1024 * 1024),
        cost_estimate=pl.CostEstimate(flops=flops, transcendentals=0,
                                      bytes_accessed=bytes_accessed),
    )(jnp.asarray([seed], jnp.int32), x2, w_bf16, b2)

    if Mp != M:
        out = out[:M]
    return out.reshape(B, N, D)


if __name__ == "__main__":
    key = jax.random.PRNGKey(0)
    kx, kw, kb = jax.random.split(key, 3)

    # Lane-dense hidden size (multiple of 128) per the perf review.
    B, N, D = 2, 8, 128
    x = jax.random.normal(kx, (B, N, D), dtype=jnp.float32)

    # Deterministic "Linear(D, D)" parameters (PyTorch weight is (out, in);
    # we store its transpose (in, out) for the kernel).
    w = jax.random.normal(kw, (D, D), dtype=jnp.float32) * (1.0 / jnp.sqrt(D))
    w_t = w.T
    b = jax.random.normal(kb, (D,), dtype=jnp.float32) * 0.02

    # Module default: dropout=0.0 -> dropout is the identity.
    out = residual_linear(x, w_t, b, seed=0, dropout_p=0.0)
    out = jax.block_until_ready(out)

    # Pure-JAX f32 reference: linear -> (no-op dropout) -> +x.  Kernel uses a
    # bf16 MXU matmul with f32 accumulation, so tolerances are loosened.
    ref = jnp.einsum("bnd,de->bne", x, w_t) + b[None, None, :] + x
    assert out.shape == x.shape and out.dtype == x.dtype
    assert jnp.allclose(out, ref, rtol=5e-2, atol=5e-2), "mismatch vs reference"

    print("KERNEL_OK")
</pallas_src>

<mosaic_0001>
module attributes {stable_mosaic.version = 11 : i64} {
  func.func @_residual_linear_kernel(%arg0: i32, %arg1: memref<1xi32, #tpu.memory_space<smem>>, %arg2: memref<256x128xf32, #tpu.memory_space<vmem>>, %arg3: memref<128x128xbf16, #tpu.memory_space<vmem>>, %arg4: memref<1x128xf32, #tpu.memory_space<vmem>>, %arg5: memref<256x128xf32, #tpu.memory_space<vmem>>) attributes {dimension_semantics = [#tpu.dimension_semantics<parallel>], iteration_bounds = array<i64: 1>, scalar_prefetch = 1 : i64, scratch_operands = 0 : i64, tpu.core_type = #tpu.core_type<tc>, window_params = [{transform_indices = @transform_0, window_bounds = array<i64: 256, 128>}, {pipeline_mode = #tpu.pipeline_mode<synchronous>, transform_indices = @transform_1, window_bounds = array<i64: 128, 128>}, {pipeline_mode = #tpu.pipeline_mode<synchronous>, transform_indices = @transform_2, window_bounds = array<i64: 1, 128>}, {transform_indices = @transform_3, window_bounds = array<i64: 256, 128>}]} {
    %c0 = arith.constant 0 : index
    %c0_0 = arith.constant 0 : index
    %0 = vector.load %arg2[%c0, %c0_0] : memref<256x128xf32, #tpu.memory_space<vmem>>, vector<256x128xf32>
    %1 = arith.truncf %0 : vector<256x128xf32> to vector<256x128xbf16>
    %c0_1 = arith.constant 0 : index
    %c0_2 = arith.constant 0 : index
    %2 = vector.load %arg3[%c0_1, %c0_2] : memref<128x128xbf16, #tpu.memory_space<vmem>>, vector<128x128xbf16>
    %cst = arith.constant dense<0.000000e+00> : vector<256x128xf32>
    %3 = tpu.matmul %1, %2, %cst {dimension_numbers = #tpu.dot_dimension_numbers<[1], [0], [0], [1], [0, 0, 1, 1], [], []>} : vector<256x128xbf16>, vector<128x128xbf16>, vector<256x128xf32> -> vector<256x128xf32>
    %c0_3 = arith.constant 0 : index
    %c0_4 = arith.constant 0 : index
    %4 = vector.load %arg4[%c0_3, %c0_4] : memref<1x128xf32, #tpu.memory_space<vmem>>, vector<1x128xf32>
    %5 = vector.broadcast %4 : vector<1x128xf32> to vector<256x128xf32>
    %6 = arith.addf %3, %5 : vector<256x128xf32>
    %7 = arith.addf %6, %0 : vector<256x128xf32>
    %c0_5 = arith.constant 0 : index
    %c0_6 = arith.constant 0 : index
    %8 = vector.load %arg5[%c0_5, %c0_6] : memref<256x128xf32, #tpu.memory_space<vmem>>, vector<256x128xf32>
    tpu.vector_store %arg5[%c0_5, %c0_6], %7 {strides = array<i32>} : memref<256x128xf32, #tpu.memory_space<vmem>>, vector<256x128xf32>,
    return
  }
  func.func @transform_0(%arg0: i32, %arg1: memref<1xi32, #tpu.memory_space<smem>>) -> (i32, i32) {
    %c0_i32 = arith.constant 0 : i32
    %c0_i32_0 = arith.constant 0 : i32
    return %arg0, %c0_i32 : i32, i32
  }
  func.func @transform_1(%arg0: i32, %arg1: memref<1xi32, #tpu.memory_space<smem>>) -> (i32, i32) {
    %c0_i32 = arith.constant 0 : i32
    %c0_i32_0 = arith.constant 0 : i32
    %c0_i32_1 = arith.constant 0 : i32
    return %c0_i32, %c0_i32_0 : i32, i32
  }
  func.func @transform_2(%arg0: i32, %arg1: memref<1xi32, #tpu.memory_space<smem>>) -> (i32, i32) {
    %c0_i32 = arith.constant 0 : i32
    %c0_i32_0 = arith.constant 0 : i32
    %c0_i32_1 = arith.constant 0 : i32
    return %c0_i32, %c0_i32_0 : i32, i32
  }
  func.func @transform_3(%arg0: i32, %arg1: memref<1xi32, #tpu.memory_space<smem>>) -> (i32, i32) {
    %c0_i32 = arith.constant 0 : i32
    %c0_i32_0 = arith.constant 0 : i32
    return %arg0, %c0_i32 : i32, i32
  }
}

</mosaic_0001>

<llo_original>
// kernel: tpu_custom_call.1
$region0: #{tpu_custom_call.1}
  #allocation0 [shape = 'u32[]', space=smem, size = 0x4, offset = 0x4, fixed_abs, tag = 'smem constant byte address 0x4 - core index']
  #allocation1 [shape = 'u32[144,128]{1,0:T(1,128)}', space=vmem, size = 0x12000, scoped, tag = 'internal scratch']
  #allocation2 [shape = 's32[1]{0}', space=sflag, size = 0x4, scoped, tag = 'scoped memory for tpu_custom_call.1']
  #allocation3 [shape = 's32[1]{0:T(128)S(6)}', space=smem, size = 0x200, scoped, tag = 'prefetched SMEM operand 0']
  %s0 = inlined_call_operand.<no memory space> [shape: s32[1], index: 0, kind: input, shape index: {}]
  %s1 = inlined_call_operand.hbm [shape: f32[256,128], index: 1, kind: input, shape index: {}]
  %s2 = inlined_call_operand.hbm [shape: bf16[128,128], index: 2, kind: input, shape index: {}]
  %s3 = inlined_call_operand.hbm [shape: f32[1,128], index: 3, kind: input, shape index: {}]
  %s4 = inlined_call_operand.hbm [shape: f32[256,128], index: 4, kind: output, shape index: {}]
  %s5 = sld [smem:[#allocation0]]
  $region34: #{tpu_custom_call.1} parent=0
    _
  %s7 = ssub.s32 1, %s5
  %s8 = scalar_select 0, %s7, %s5
  %9 = sst [smem:[#allocation3]] %s0
  $region1: #{tpu_custom_call.1} parent=0
    #allocation4 [shape = 'u8[131072]{0}', space=vmem, size = 0x20000, scoped, tag = 'input window, operand 1, single buffered']
    #allocation5 [shape = 's32[1]{0}', space=sflag, size = 0x4, scoped, tag = 'scoped memory for tpu_custom_call.1']
    #allocation6 [shape = 's32[1]{0}', space=sflag, size = 0x4, scoped, tag = 'scoped memory for tpu_custom_call.1']
    #allocation7 [shape = 'u8[32768]{0}', space=vmem, size = 0x8000, scoped, tag = 'input window, operand 2, single buffered']
    #allocation8 [shape = 's32[1]{0}', space=sflag, size = 0x4, scoped, tag = 'scoped memory for tpu_custom_call.1']
    #allocation9 [shape = 'u8[512]{0}', space=vmem, size = 0x400, scoped, tag = 'input window, operand 3, single buffered']
    #allocation10 [shape = 'u8[131072]{0}', space=vmem, size = 0x20000, scoped, tag = 'output window, operand 0, single buffered']
    %10 = vsyncpa [#allocation5], 0
    %11 = vsyncpa [#allocation8], 0
    %12 = vsyncpa [#allocation6], 0
    // Predicated region
    $region2: #{tpu_custom_call.1} parent=1 // pred_check
      _
    $region3: #{tpu_custom_call.1} parent=1 // pred_check_branch
      %14 = sbr.rel (0) target = $region5
    $region4: #{tpu_custom_call.1} parent=1 // pred_region
      %s16 = ssub.s32 4096, 4096
      %17 = vsyncadd [#allocation5], %s16
      %s18 = sshll.u32 [#allocation4], 4
      %s19 = int_to_ptr.vmem [resolvable:$true] %s18
      %24 = dma.hbm_to_vmem [thread:$0]  %s1, 4096, %s19, [#allocation5], 128, 128, 8
    $region5: #{tpu_custom_call.1} parent=1 // pred_fallthru
      _
    // Predicated region
    $region6: #{tpu_custom_call.1} parent=1 // pred_check
      _
    $region7: #{tpu_custom_call.1} parent=1 // pred_check_branch
      %26 = sbr.rel (0) target = $region9
    $region8: #{tpu_custom_call.1} parent=1 // pred_region
      %s28 = ssub.s32 1024, 1024
      %29 = vsyncadd [#allocation8], %s28
      %s30 = sshll.u32 [#allocation7], 4
      %s31 = int_to_ptr.vmem [resolvable:$true] %s30
      %36 = dma.hbm_to_vmem [thread:$0]  %s2, 1024, %s31, [#allocation8], 64, 64, 4
    $region9: #{tpu_custom_call.1} parent=1 // pred_fallthru
      _
    // Predicated region
    $region10: #{tpu_custom_call.1} parent=1 // pred_check
      _
    $region11: #{tpu_custom_call.1} parent=1 // pred_check_branch
      %38 = sbr.rel (0) target = $region13
    $region12: #{tpu_custom_call.1} parent=1 // pred_region
      %s40 = ssub.s32 16, 16
      %41 = vsyncadd [#allocation8], %s40
      %s43 = sshll.u32 [#allocation9], 4
      %s44 = int_to_ptr.vmem [resolvable:$true] %s43
      %46 = dma.hbm_to_vmem [thread:$0]  %s3, 16, %s44, [#allocation8]
    $region13: #{tpu_custom_call.1} parent=1 // pred_fallthru
      _
    // Predicated region
    $region14: #{tpu_custom_call.1} parent=1 // pred_check
      _
    $region15: #{tpu_custom_call.1} parent=1 // pred_check_branch
      %48 = sbr.rel (0) target = $region17
    $region16: #{tpu_custom_call.1} parent=1 // pred_region
      %49 = dma.done [#allocation5], 4096
    $region17: #{tpu_custom_call.1} parent=1 // pred_fallthru
      _
    // Predicated region
    $region18: #{tpu_custom_call.1} parent=1 // pred_check
      _
    $region19: #{tpu_custom_call.1} parent=1 // pred_check_branch
      %51 = sbr.rel (0) target = $region21
    $region20: #{tpu_custom_call.1} parent=1 // pred_region
      %52 = dma.done [#allocation8], 1024
    $region21: #{tpu_custom_call.1} parent=1 // pred_fallthru
      _
    // Predicated region
    $region22: #{tpu_custom_call.1} parent=1 // pred_check
      _
    $region23: #{tpu_custom_call.1} parent=1 // pred_check_branch
      %54 = sbr.rel (0) target = $region25
    $region24: #{tpu_custom_call.1} parent=1 // pred_region
      %55 = dma.done [#allocation8], 16
    $region25: #{tpu_custom_call.1} parent=1 // pred_fallthru
      _
    %v57 = vld [vmem:[#allocation4] sm:$0xff]
    %v58 = vld [vmem:[#allocation4 + $0x8] sm:$0xff]
    %v59 = vld [vmem:[#allocation4 + $0x10] sm:$0xff]
    %v60 = vld [vmem:[#allocation4 + $0x18] sm:$0xff]
    %v61 = vld [vmem:[#allocation4 + $0x20] sm:$0xff]
    %v62 = vld [vmem:[#allocation4 + $0x28] sm:$0xff]
    %v63 = vld [vmem:[#allocation4 + $0x30] sm:$0xff]
    %v64 = vld [vmem:[#allocation4 + $0x38] sm:$0xff]
    %v65 = vld [vmem:[#allocation4 + $0x40] sm:$0xff]
    %v66 = vld [vmem:[#allocation4 + $0x48] sm:$0xff]
    %v67 = vld [vmem:[#allocation4 + $0x50] sm:$0xff]
    %v68 = vld [vmem:[#allocation4 + $0x58] sm:$0xff]
    %v69 = vld [vmem:[#allocation4 + $0x60] sm:$0xff]
    %v70 = vld [vmem:[#allocation4 + $0x68] sm:$0xff]
    %v71 = vld [vmem:[#allocation4 + $0x70] sm:$0xff]
    %v72 = vld [vmem:[#allocation4 + $0x78] sm:$0xff]
    %v73 = vld [vmem:[#allocation4 + $0x80] sm:$0xff]
    %v74 = vld [vmem:[#allocation4 + $0x88] sm:$0xff]
    %v75 = vld [vmem:[#allocation4 + $0x90] sm:$0xff]
    %v76 = vld [vmem:[#allocation4 + $0x98] sm:$0xff]
    %v77 = vld [vmem:[#allocation4 + $0xa0] sm:$0xff]
    %v78 = vld [vmem:[#allocation4 + $0xa8] sm:$0xff]
    %v79 = vld [vmem:[#allocation4 + $0xb0] sm:$0xff]
    %v80 = vld [vmem:[#allocation4 + $0xb8] sm:$0xff]
    %v81 = vld [vmem:[#allocation4 + $0xc0] sm:$0xff]
    %v82 = vld [vmem:[#allocation4 + $0xc8] sm:$0xff]
    %v83 = vld [vmem:[#allocation4 + $0xd0] sm:$0xff]
    %v84 = vld [vmem:[#allocation4 + $0xd8] sm:$0xff]
    %v85 = vld [vmem:[#allocation4 + $0xe0] sm:$0xff]
    %v86 = vld [vmem:[#allocation4 + $0xe8] sm:$0xff]
    %v87 = vld [vmem:[#allocation4 + $0xf0] sm:$0xff]
    %v88 = vld [vmem:[#allocation4 + $0xf8] sm:$0xff]
    %v89 = vpack.c.bf16 %v58, %v57
    %v90 = vpack.c.bf16 %v60, %v59
    %v91 = vpack.c.bf16 %v62, %v61
    %v92 = vpack.c.bf16 %v64, %v63
    %v93 = vpack.c.bf16 %v66, %v65
    %v94 = vpack.c.bf16 %v68, %v67
    %v95 = vpack.c.bf16 %v70, %v69
    %v96 = vpack.c.bf16 %v72, %v71
    %v97 = vpack.c.bf16 %v74, %v73
    %v98 = vpack.c.bf16 %v76, %v75
    %v99 = vpack.c.bf16 %v78, %v77
    %v100 = vpack.c.bf16 %v80, %v79
    %v101 = vpack.c.bf16 %v82, %v81
    %v102 = vpack.c.bf16 %v84, %v83
    %v103 = vpack.c.bf16 %v86, %v85
    %v104 = vpack.c.bf16 %v88, %v87
    %v105 = vld [vmem:[#allocation7] sm:$0xf]
    %v106 = vld [vmem:[#allocation7 + $0x4] sm:$0xf]
    %v107 = vld [vmem:[#allocation7 + $0x8] sm:$0xf]
    %v108 = vld [vmem:[#allocation7 + $0xc] sm:$0xf]
    %v109 = vld [vmem:[#allocation7 + $0x10] sm:$0xf]
    %v110 = vld [vmem:[#allocation7 + $0x14] sm:$0xf]
    %v111 = vld [vmem:[#allocation7 + $0x18] sm:$0xf]
    %v112 = vld [vmem:[#allocation7 + $0x1c] sm:$0xf]
    %v113 = vld [vmem:[#allocation7 + $0x20] sm:$0xf]
    %v114 = vld [vmem:[#allocation7 + $0x24] sm:$0xf]
    %v115 = vld [vmem:[#allocation7 + $0x28] sm:$0xf]
    %v116 = vld [vmem:[#allocation7 + $0x2c] sm:$0xf]
    %v117 = vld [vmem:[#allocation7 + $0x30] sm:$0xf]
    %v118 = vld [vmem:[#allocation7 + $0x34] sm:$0xf]
    %v119 = vld [vmem:[#allocation7 + $0x38] sm:$0xf]
    %v120 = vld [vmem:[#allocation7 + $0x3c] sm:$0xf]
    %v121 = vld [vmem:[#allocation9] sm:$0x1]
    %v123 = vlaneseq
    %v124 = vshrl.u32 %v123, 7
    %v125 = vsub.s32 0, %v124
    %v126 = vrot.slane %v121, %v125
    %v144 = vunpack.c.l.b16 %v105
    %v145 = vunpack.c.l.b16 %v106
    %v146 = vunpack.c.l.b16 %v107
    %v147 = vunpack.c.l.b16 %v108
    %v148 = vunpack.c.l.b16 %v109
    %v149 = vunpack.c.l.b16 %v110
    %v150 = vunpack.c.l.b16 %v111
    %v151 = vunpack.c.l.b16 %v112
    %v152 = vunpack.c.l.b16 %v113
    %v153 = vunpack.c.l.b16 %v114
    %v154 = vunpack.c.l.b16 %v115
    %v155 = vunpack.c.l.b16 %v116
    %v156 = vunpack.c.l.b16 %v117
    %v157 = vunpack.c.l.b16 %v118
    %v158 = vunpack.c.l.b16 %v119
    %v159 = vunpack.c.l.b16 %v120
    %v160 = vpack.c.b16 %v145, %v144
    %v161 = vpack.c.b16 %v147, %v146
    %v162 = vpack.c.b16 %v149, %v148
    %v163 = vpack.c.b16 %v151, %v150
    %v164 = vpack.c.b16 %v153, %v152
    %v165 = vpack.c.b16 %v155, %v154
    %v166 = vpack.c.b16 %v157, %v156
    %v167 = vpack.c.b16 %v159, %v158
    %176 = vmatprep.subr.bf16.mxu0 0
    %177 = vmatpush1.bf16.msra.mxu0 %v160
    %178 = vmatprep.subr.bf16.mxu0 0
    %179 = vmatpush1.bf16.msra.mxu0 %v161
    %180 = vmatprep.subr.bf16.mxu0 0
    %181 = vmatpush1.bf16.msra.mxu0 %v162
    %182 = vmatprep.subr.bf16.mxu0 0
    %183 = vmatpush1.bf16.msra.mxu0 %v163
    %184 = vmatprep.subr.bf16.mxu0 0
    %185 = vmatpush1.bf16.msra.mxu0 %v164
    %186 = vmatprep.subr.bf16.mxu0 0
    %187 = vmatpush1.bf16.msra.mxu0 %v165
    %188 = vmatprep.subr.bf16.mxu0 0
    %189 = vmatpush1.bf16.msra.mxu0 %v166
    %190 = vmatprep.subr.bf16.mxu0 0
    %191 = vmatpush1.bf16.msra.mxu0 %v167
    %192 = vmatprep.subr.bf16.mxu0 0
    %193 = vmatpush1.bf16.msra.mxu0 0
    %194 = vmatprep.subr.bf16.mxu0 0
    %195 = vmatpush1.bf16.msra.mxu0 0
    %196 = vmatprep.subr.bf16.mxu0 0
    %197 = vmatpush1.bf16.msra.mxu0 0
    %198 = vmatprep.subr.bf16.mxu0 0
    %199 = vmatpush1.bf16.msra.mxu0 0
    %200 = vmatprep.subr.bf16.mxu0 0
    %201 = vmatpush1.bf16.msra.mxu0 0
    %202 = vmatprep.subr.bf16.mxu0 0
    %203 = vmatpush1.bf16.msra.mxu0 0
    %204 = vmatprep.subr.bf16.mxu0 0
    %205 = vmatpush1.bf16.msra.mxu0 0
    %206 = vmatprep.subr.bf16.mxu0 0
    %207 = vmatpush1.bf16.msra.mxu0 0
    %208 = vmatprep.mubr.bf16.mxu0 0
    %209 = vmatmul.mubr.bf16.gmra.mrb[0].mxu0 %v89
    %v210 = vpop.f32.mrb[0].mxu0
    %v211 = vadd.f32 %v126, %v210
    %v212 = vpop.f32.mrb[0].mxu0
    %v213 = vpop.f32.mrb[0].mxu0
    %v214 = vadd.f32 %v126, %v213
    %v215 = vpop.f32.mrb[0].mxu0
    %216 = vmatprep.mubr.bf16.mxu0 0
    %217 = vmatmul.mubr.bf16.gmra.mrb[0].mxu0 %v90
    %v218 = vpop.f32.mrb[0].mxu0
    %v219 = vadd.f32 %v126, %v218
    %v220 = vpop.f32.mrb[0].mxu0
    %v221 = vpop.f32.mrb[0].mxu0
    %v222 = vadd.f32 %v126, %v221
    %v223 = vpop.f32.mrb[0].mxu0
    %224 = vmatprep.mubr.bf16.mxu0 0
    %225 = vmatmul.mubr.bf16.gmra.mrb[0].mxu0 %v91
    %v226 = vpop.f32.mrb[0].mxu0
    %v227 = vadd.f32 %v126, %v226
    %v228 = vpop.f32.mrb[0].mxu0
    %v229 = vpop.f32.mrb[0].mxu0
    %v230 = vadd.f32 %v126, %v229
    %v231 = vpop.f32.mrb[0].mxu0
    %232 = vmatprep.mubr.bf16.mxu0 0
    %233 = vmatmul.mubr.bf16.gmra.mrb[0].mxu0 %v92
    %v234 = vpop.f32.mrb[0].mxu0
    %v235 = vadd.f32 %v126, %v234
    %v236 = vpop.f32.mrb[0].mxu0
    %v237 = vpop.f32.mrb[0].mxu0
    %v238 = vadd.f32 %v126, %v237
    %v239 = vpop.f32.mrb[0].mxu0
    %240 = vmatprep.mubr.bf16.mxu0 0
    %241 = vmatmul.mubr.bf16.gmra.mrb[0].mxu0 %v93
    %v242 = vpop.f32.mrb[0].mxu0
    %v243 = vadd.f32 %v126, %v242
    %v244 = vpop.f32.mrb[0].mxu0
    %v245 = vpop.f32.mrb[0].mxu0
    %v246 = vadd.f32 %v126, %v245
    %v247 = vpop.f32.mrb[0].mxu0
    %248 = vmatprep.mubr.bf16.mxu0 0
    %249 = vmatmul.mubr.bf16.gmra.mrb[0].mxu0 %v94
    %v250 = vpop.f32.mrb[0].mxu0
    %v251 = vadd.f32 %v126, %v250
    %v252 = vpop.f32.mrb[0].mxu0
    %v253 = vpop.f32.mrb[0].mxu0
    %v254 = vadd.f32 %v126, %v253
    %v255 = vpop.f32.mrb[0].mxu0
    %256 = vmatprep.mubr.bf16.mxu0 0
    %257 = vmatmul.mubr.bf16.gmra.mrb[0].mxu0 %v95
    %v258 = vpop.f32.mrb[0].mxu0
    %v259 = vadd.f32 %v126, %v258
    %v260 = vpop.f32.mrb[0].mxu0
    %v261 = vpop.f32.mrb[0].mxu0
    %v262 = vadd.f32 %v126, %v261
    %v263 = vpop.f32.mrb[0].mxu0
    %264 = vmatprep.mubr.bf16.mxu0 0
    %265 = vmatmul.mubr.bf16.gmra.mrb[0].mxu0 %v96
    %v266 = vpop.f32.mrb[0].mxu0
    %v267 = vadd.f32 %v126, %v266
    %v268 = vpop.f32.mrb[0].mxu0
    %v269 = vpop.f32.mrb[0].mxu0
    %v270 = vadd.f32 %v126, %v269
    %v271 = vpop.f32.mrb[0].mxu0
    %272 = vmatprep.mubr.bf16.mxu0 0
    %273 = vmatmul.mubr.bf16.gmra.mrb[0].mxu0 %v97
    %v274 = vpop.f32.mrb[0].mxu0
    %v275 = vadd.f32 %v126, %v274
    %v276 = vpop.f32.mrb[0].mxu0
    %v277 = vpop.f32.mrb[0].mxu0
    %v278 = vadd.f32 %v126, %v277
    %v279 = vpop.f32.mrb[0].mxu0
    %280 = vmatprep.mubr.bf16.mxu0 0
    %281 = vmatmul.mubr.bf16.gmra.mrb[0].mxu0 %v98
    %v282 = vpop.f32.mrb[0].mxu0
    %v283 = vadd.f32 %v126, %v282
    %v284 = vpop.f32.mrb[0].mxu0
    %v285 = vpop.f32.mrb[0].mxu0
    %v286 = vadd.f32 %v126, %v285
    %v287 = vpop.f32.mrb[0].mxu0
    %288 = vmatprep.mubr.bf16.mxu0 0
    %289 = vmatmul.mubr.bf16.gmra.mrb[0].mxu0 %v99
    %v290 = vpop.f32.mrb[0].mxu0
    %v291 = vadd.f32 %v126, %v290
    %v292 = vpop.f32.mrb[0].mxu0
    %v293 = vpop.f32.mrb[0].mxu0
    %v294 = vadd.f32 %v126, %v293
    %v295 = vpop.f32.mrb[0].mxu0
    %296 = vmatprep.mubr.bf16.mxu0 0
    %297 = vmatmul.mubr.bf16.gmra.mrb[0].mxu0 %v100
    %v298 = vpop.f32.mrb[0].mxu0
    %v299 = vadd.f32 %v126, %v298
    %v300 = vpop.f32.mrb[0].mxu0
    %v301 = vpop.f32.mrb[0].mxu0
    %v302 = vadd.f32 %v126, %v301
    %v303 = vpop.f32.mrb[0].mxu0
    %304 = vmatprep.mubr.bf16.mxu0 0
    %305 = vmatmul.mubr.bf16.gmra.mrb[0].mxu0 %v101
    %v306 = vpop.f32.mrb[0].mxu0
    %v307 = vadd.f32 %v126, %v306
    %v308 = vpop.f32.mrb[0].mxu0
    %v309 = vpop.f32.mrb[0].mxu0
    %v310 = vadd.f32 %v126, %v309
    %v311 = vpop.f32.mrb[0].mxu0
    %312 = vmatprep.mubr.bf16.mxu0 0
    %313 = vmatmul.mubr.bf16.gmra.mrb[0].mxu0 %v102
    %v314 = vpop.f32.mrb[0].mxu0
    %v315 = vadd.f32 %v126, %v314
    %v316 = vpop.f32.mrb[0].mxu0
    %v317 = vpop.f32.mrb[0].mxu0
    %v318 = vadd.f32 %v126, %v317
    %v319 = vpop.f32.mrb[0].mxu0
    %320 = vmatprep.mubr.bf16.mxu0 0
    %321 = vmatmul.mubr.bf16.gmra.mrb[0].mxu0 %v103
    %v322 = vpop.f32.mrb[0].mxu0
    %v323 = vadd.f32 %v126, %v322
    %v324 = vpop.f32.mrb[0].mxu0
    %v325 = vpop.f32.mrb[0].mxu0
    %v326 = vadd.f32 %v126, %v325
    %v327 = vpop.f32.mrb[0].mxu0
    %328 = vmatprep.mubr.bf16.mxu0 0
    %329 = vmatmul.mubr.bf16.gmra.mrb[0].mxu0 %v104
    %v330 = vpop.f32.mrb[0].mxu0
    %v331 = vadd.f32 %v126, %v330
    %v332 = vpop.f32.mrb[0].mxu0
    %v333 = vpop.f32.mrb[0].mxu0
    %v334 = vadd.f32 %v126, %v333
    %v335 = vpop.f32.mrb[0].mxu0
    %336 = vdwg.mxu0
    %v337 = vadd.f32 %v211, %v57
    %v338 = vadd.f32 %v214, %v58
    %v339 = vadd.f32 %v219, %v59
    %v340 = vadd.f32 %v222, %v60
    %v341 = vadd.f32 %v227, %v61
    %v342 = vadd.f32 %v230, %v62
    %v343 = vadd.f32 %v235, %v63
    %v344 = vadd.f32 %v238, %v64
    %v345 = vadd.f32 %v243, %v65
    %v346 = vadd.f32 %v246, %v66
    %v347 = vadd.f32 %v251, %v67
    %v348 = vadd.f32 %v254, %v68
    %v349 = vadd.f32 %v259, %v69
    %v350 = vadd.f32 %v262, %v70
    %v351 = vadd.f32 %v267, %v71
    %v352 = vadd.f32 %v270, %v72
    %v353 = vadd.f32 %v275, %v73
    %v354 = vadd.f32 %v278, %v74
    %v355 = vadd.f32 %v283, %v75
    %v356 = vadd.f32 %v286, %v76
    %v357 = vadd.f32 %v291, %v77
    %v358 = vadd.f32 %v294, %v78
    %v359 = vadd.f32 %v299, %v79
    %v360 = vadd.f32 %v302, %v80
    %v361 = vadd.f32 %v307, %v81
    %v362 = vadd.f32 %v310, %v82
    %v363 = vadd.f32 %v315, %v83
    %v364 = vadd.f32 %v318, %v84
    %v365 = vadd.f32 %v323, %v85
    %v366 = vadd.f32 %v326, %v86
    %v367 = vadd.f32 %v331, %v87
    %v368 = vadd.f32 %v334, %v88
    %369 = vst [vmem:[#allocation10] sm:$0xff] %v337
    %370 = vst [vmem:[#allocation10 + $0x8] sm:$0xff] %v338
    %371 = vst [vmem:[#allocation10 + $0x10] sm:$0xff] %v339
    %372 = vst [vmem:[#allocation10 + $0x18] sm:$0xff] %v340
    %373 = vst [vmem:[#allocation10 + $0x20] sm:$0xff] %v341
    %374 = vst [vmem:[#allocation10 + $0x28] sm:$0xff] %v342
    %375 = vst [vmem:[#allocation10 + $0x30] sm:$0xff] %v343
    %376 = vst [vmem:[#allocation10 + $0x38] sm:$0xff] %v344
    %377 = vst [vmem:[#allocation10 + $0x40] sm:$0xff] %v345
    %378 = vst [vmem:[#allocation10 + $0x48] sm:$0xff] %v346
    %379 = vst [vmem:[#allocation10 + $0x50] sm:$0xff] %v347
    %380 = vst [vmem:[#allocation10 + $0x58] sm:$0xff] %v348
    %381 = vst [vmem:[#allocation10 + $0x60] sm:$0xff] %v349
    %382 = vst [vmem:[#allocation10 + $0x68] sm:$0xff] %v350
    %383 = vst [vmem:[#allocation10 + $0x70] sm:$0xff] %v351
    %384 = vst [vmem:[#allocation10 + $0x78] sm:$0xff] %v352
    %385 = vst [vmem:[#allocation10 + $0x80] sm:$0xff] %v353
    %386 = vst [vmem:[#allocation10 + $0x88] sm:$0xff] %v354
    %387 = vst [vmem:[#allocation10 + $0x90] sm:$0xff] %v355
    %388 = vst [vmem:[#allocation10 + $0x98] sm:$0xff] %v356
    %389 = vst [vmem:[#allocation10 + $0xa0] sm:$0xff] %v357
    %390 = vst [vmem:[#allocation10 + $0xa8] sm:$0xff] %v358
    %391 = vst [vmem:[#allocation10 + $0xb0] sm:$0xff] %v359
    %392 = vst [vmem:[#allocation10 + $0xb8] sm:$0xff] %v360
    %393 = vst [vmem:[#allocation10 + $0xc0] sm:$0xff] %v361
    %394 = vst [vmem:[#allocation10 + $0xc8] sm:$0xff] %v362
    %395 = vst [vmem:[#allocation10 + $0xd0] sm:$0xff] %v363
    %396 = vst [vmem:[#allocation10 + $0xd8] sm:$0xff] %v364
    %397 = vst [vmem:[#allocation10 + $0xe0] sm:$0xff] %v365
    %398 = vst [vmem:[#allocation10 + $0xe8] sm:$0xff] %v366
    %399 = vst [vmem:[#allocation10 + $0xf0] sm:$0xff] %v367
    %400 = vst [vmem:[#allocation10 + $0xf8] sm:$0xff] %v368
    // Predicated region
    $region26: #{tpu_custom_call.1} parent=1 // pred_check
      _
    $region27: #{tpu_custom_call.1} parent=1 // pred_check_branch
      %402 = sbr.rel (0) target = $region29
    $region28: #{tpu_custom_call.1} parent=1 // pred_region
      %s404 = ssub.s32 4096, 4096
      %405 = vsyncadd [#allocation6], %s404
      %s406 = sshll.u32 [#allocation10], 4
      %s407 = int_to_ptr.vmem [resolvable:$true] %s406
      %412 = dma.vmem_to_hbm [thread:$0]  %s407, 4096, %s4, [#allocation6], 128, 128, 8
    $region29: #{tpu_custom_call.1} parent=1 // pred_fallthru
      _
    // Predicated region
    $region30: #{tpu_custom_call.1} parent=1 // pred_check
      _
    $region31: #{tpu_custom_call.1} parent=1 // pred_check_branch
      %414 = sbr.rel (0) target = $region33
    $region32: #{tpu_custom_call.1} parent=1 // pred_region
      %415 = dma.done [#allocation6], 4096
    $region33: #{tpu_custom_call.1} parent=1 // pred_fallthru
      _
    %416 = vsyncpa [#allocation5], 1
    %417 = vsyncpa [#allocation8], 1
    %418 = vsyncpa [#allocation6], 1

</llo_original>
